<compile_context>
chip_gen: v7x
topology: tpu7x:2x2x1
jax: 0.10.0
libtpu: 0.0.40
codegen_flags: <defaults>
</compile_context>

<pallas_src>
import functools

import jax
import jax.numpy as jnp
from jax import lax
from jax.experimental import pallas as pl
from jax.experimental.pallas import tpu as pltpu


_MAX_TM = 8192
_MIN_TM = 8


def _round_up(x, m):
    return (x + m - 1) // m * m


def _vmem_limit_bytes():
    # Raise the scoped VMEM limit (v5e default is only 16 MiB, v6e/v7x 32 MiB)
    # but stay well under physical capacity (64 MiB on v7x, 128 MiB elsewhere).
    try:
        cap = int(pltpu.get_tpu_info().vmem_capacity_bytes)
        return int(min(96 * 1024 * 1024, cap * 3 // 4))
    except Exception:
        return 48 * 1024 * 1024


def _num_tensorcores():
    # 2 TensorCores visible to one Pallas program on v4/v5p (megacore) and
    # v7x; a single TC on v5e/v6e.  Correctness does not depend on this value
    # (extra cores only produce masked-out duplicate blocks), only perf does.
    try:
        kind = jax.devices()[0].device_kind.lower()
        if ("v4" in kind) or ("v5p" in kind) or ("7" in kind):
            return 2
    except Exception:
        pass
    return 1


def _choose_tm(n, c, in_itemsize, vmem_limit):
    # Per-row VMEM bytes: 2x double-buffered input block plus roughly four
    # (tm, C) f32 temporaries materialized by the kernel body.
    per_row = c * (2 * in_itemsize + 4 * 4) + 64
    tm = int(vmem_limit * 0.6) // max(per_row, 1)
    tm = min(tm, _MAX_TM)
    tm = (tm // 8) * 8
    tm = max(tm, _MIN_TM)
    tm = min(tm, _round_up(n, 8))   # don't tile past the batch
    return max(tm, _MIN_TM)


def _row_loss(pred, gt_i32, eps):
    """pred: (tm, C) in input dtype (f32/bf16), gt_i32: (tm, 1) i32.

    smoothed weights: w_gt = 1 - eps, w_off = eps/(C-1), sum_c w_c == 1, so
        loss = -sum_c w_c * log_softmax(pred)_c
             = logsumexp(pred) - sum_c w_c * pred_c
    Only 3 cross-lane reductions: max, exp-sum (f32 accum), one weighted sum.
    """
    tm, C = pred.shape
    coef_off = eps / max(C - 1, 1)
    w_on = 1.0 - eps            # coef_off + (1 - eps - coef_off)

    # max + (pred - m) stay in the input dtype (bf16 prologue on v6e/v7x);
    # exp-sum accumulates in f32.
    m = jnp.max(pred, axis=1, keepdims=True)
    e = jnp.exp((pred - m).astype(jnp.float32))
    lse = m.astype(jnp.float32) + jnp.log(jnp.sum(e, axis=1, keepdims=True))

    classes = lax.broadcasted_iota(jnp.int32, (tm, C), 1)
    w = jnp.where(classes == gt_i32, jnp.float32(w_on), jnp.float32(coef_off))
    wsum = jnp.sum(w * pred.astype(jnp.float32), axis=1, keepdims=True)
    return lse - wsum                                            # (tm, 1) f32


def _ls_reduce_kernel(pred_ref, gt_ref, out_ref, *, eps, total_n):
    """Accumulate per-row losses into a resident (tm, 1) f32 output block.

    Grid is (ncores, blocks_per_core); the output block depends only on the
    parallel core axis, so it stays resident across the arbitrary block axis.
    Rows past the real batch (ragged final block, clamped duplicate blocks on
    2-TC chips) are masked out by global row index with a select (NaN-safe).
    """
    j = pl.program_id(1)

    @pl.when(j == 0)
    def _():
        out_ref[...] = jnp.zeros_like(out_ref)

    loss = _row_loss(pred_ref[...], gt_ref[...], eps)
    tm = loss.shape[0]
    base = (pl.program_id(0) * pl.num_programs(1) + j) * tm
    row = base + lax.broadcasted_iota(jnp.int32, (tm, 1), 0)
    out_ref[...] += jnp.where(row < total_n, loss, 0.0)


def _ls_none_kernel(pred_ref, gt_ref, out_ref, *, eps):
    out_ref[...] = _row_loss(pred_ref[...], gt_ref[...], eps)


def label_smoothing_loss(pred, gt, eps=0.2, reduction='mean', tm=None):
    """pred: (N, C) float (f32 or bf16), gt: (N,) int.

    Returns a scalar for reduction in ('sum', 'mean') or (N,) for 'none'.
    """
    assert reduction in ('sum', 'mean', 'none')
    assert pred.ndim == 2
    N, C = pred.shape

    vmem_limit = _vmem_limit_bytes()
    if tm is None:
        tm = _choose_tm(N, C, pred.dtype.itemsize, vmem_limit)
    else:
        tm = max(_MIN_TM, (int(tm) // 8) * 8)

    gt2 = gt.reshape(N, 1).astype(jnp.int32)
    n_blocks = pl.cdiv(N, tm)

    if reduction == 'none':
        out = pl.pallas_call(
            functools.partial(_ls_none_kernel, eps=eps),
            out_shape=jax.ShapeDtypeStruct((n_blocks * tm, 1), jnp.float32),
            grid_spec=pltpu.PrefetchScalarGridSpec(
                num_scalar_prefetch=0,
                grid=(n_blocks,),
                in_specs=[pl.BlockSpec((tm, C), lambda i: (i, 0)),
                          pl.BlockSpec((tm, 1), lambda i: (i, 0))],
                out_specs=pl.BlockSpec((tm, 1), lambda i: (i, 0)),
            ),
            compiler_params=pltpu.CompilerParams(
                dimension_semantics=("parallel",),
                vmem_limit_bytes=vmem_limit),
        )(pred, gt2)
        return out[:N, 0]

    # --- sum / mean: per-core resident accumulator over row blocks ---------
    ncores = max(1, min(_num_tensorcores(), n_blocks))
    blocks_per_core = pl.cdiv(n_blocks, ncores)
    last_block = n_blocks - 1

    def in_block(c, j):
        # Clamp so out-of-range steps (odd n_blocks on 2-TC chips) re-read the
        # last valid block instead of issuing an OOB DMA; those rows are >= N
        # and get masked out in the kernel.
        return (jnp.minimum(c * blocks_per_core + j, last_block), 0)

    out = pl.pallas_call(
        functools.partial(_ls_reduce_kernel, eps=eps, total_n=N),
        out_shape=jax.ShapeDtypeStruct((ncores * tm, 1), jnp.float32),
        grid_spec=pltpu.PrefetchScalarGridSpec(
            num_scalar_prefetch=0,
            grid=(ncores, blocks_per_core),
            in_specs=[pl.BlockSpec((tm, C), in_block),
                      pl.BlockSpec((tm, 1), in_block)],
            # output block depends only on the parallel core axis -> resident
            # per-core accumulator across the arbitrary block axis
            out_specs=pl.BlockSpec((tm, 1), lambda c, j: (c, 0)),
        ),
        compiler_params=pltpu.CompilerParams(
            dimension_semantics=("parallel", "arbitrary"),
            vmem_limit_bytes=vmem_limit),
    )(pred, gt2)

    total = jnp.sum(out)   # tiny (<= ncores*tm values) final reduction in XLA
    if reduction == 'mean':
        total = total / jnp.float32(N)
    return total


def _reference(pred, gt, eps=0.2, reduction='mean'):
    N, C = pred.shape
    one_hot = jax.nn.one_hot(gt, C, dtype=jnp.float32)
    one_hot = one_hot * (1.0 - eps) + (1.0 - one_hot) * (eps / (C - 1))
    log_prb = jax.nn.log_softmax(pred.astype(jnp.float32), axis=1)
    loss = -(one_hot * log_prb).sum(axis=1)
    if reduction == 'sum':
        return loss.sum()
    if reduction == 'mean':
        return loss.mean()
    return loss


if __name__ == "__main__":
    k0, k1, k2, k3 = jax.random.split(jax.random.PRNGKey(0), 4)

    # Small demo shapes: 16 samples, 16 classes (single block, auto tile).
    N, C = 16, 16
    pred = jax.random.normal(k0, (N, C), dtype=jnp.float32)
    gt = jax.random.randint(k1, (N,), 0, C, dtype=jnp.int32)
    for reduction in ("mean", "sum", "none"):
        out = jax.block_until_ready(
            label_smoothing_loss(pred, gt, eps=0.2, reduction=reduction))
        ref = _reference(pred, gt, 0.2, reduction)
        assert jnp.allclose(out, ref, atol=1e-4, rtol=1e-4), (reduction, out, ref)

    # Ragged batch (N % tm != 0): exercises the unpadded partial edge block,
    # the row mask, and (on 2-TC chips) the clamped duplicate block.
    N2, C2 = 100, 16
    pred2 = jax.random.normal(k2, (N2, C2), dtype=jnp.float32)
    gt2 = jax.random.randint(k3, (N2,), 0, C2, dtype=jnp.int32)
    for reduction in ("mean", "sum", "none"):
        out = jax.block_until_ready(
            label_smoothing_loss(pred2, gt2, eps=0.2, reduction=reduction, tm=16))
        ref = _reference(pred2, gt2, 0.2, reduction)
        assert jnp.allclose(out, ref, atol=1e-4, rtol=1e-4), (reduction, out, ref)

    # bf16 logits: bf16 prologue (max / subtract) + f32 accumulation.
    pred_bf = pred2.astype(jnp.bfloat16)
    for reduction in ("mean", "sum", "none"):
        out = jax.block_until_ready(
            label_smoothing_loss(pred_bf, gt2, eps=0.2, reduction=reduction))
        ref = _reference(pred_bf, gt2, 0.2, reduction)
        assert jnp.allclose(out, ref, atol=1e-1, rtol=2e-2), (reduction, out, ref)

    print("KERNEL_OK")
</pallas_src>

<mosaic_0001>
module attributes {stable_mosaic.version = 11 : i64} {
  func.func @_ls_reduce_kernel(%arg0: i32, %arg1: i32, %arg2: memref<16x16xf32, #tpu.memory_space<vmem>>, %arg3: memref<16x1xi32, #tpu.memory_space<vmem>>, %arg4: memref<16x1xf32, #tpu.memory_space<vmem>>) attributes {dimension_semantics = [#tpu.dimension_semantics<parallel>, #tpu.dimension_semantics<arbitrary>], iteration_bounds = array<i64: 1, 1>, scalar_prefetch = 0 : i64, scratch_operands = 0 : i64, tpu.core_type = #tpu.core_type<tc>, window_params = [{transform_indices = @transform_0, window_bounds = array<i64: 16, 16>}, {transform_indices = @transform_1, window_bounds = array<i64: 16, 1>}, {transform_indices = @transform_2, window_bounds = array<i64: 16, 1>}]} {
    %c0_i32 = arith.constant 0 : i32
    %0 = arith.cmpi eq, %arg1, %c0_i32 : i32
    %1 = arith.extui %0 : i1 to i32
    %c0_i32_0 = arith.constant 0 : i32
    %2 = arith.cmpi ne, %1, %c0_i32_0 : i32
    scf.if %2 {
      %cst_14 = arith.constant 0.000000e+00 : f32
      %37 = vector.broadcast %cst_14 : f32 to vector<16x1xf32>
      %c0_15 = arith.constant 0 : index
      %c0_16 = arith.constant 0 : index
      %38 = vector.load %arg4[%c0_15, %c0_16] : memref<16x1xf32, #tpu.memory_space<vmem>>, vector<16x1xf32>
      tpu.vector_store %arg4[%c0_15, %c0_16], %37 {strides = array<i32>} : memref<16x1xf32, #tpu.memory_space<vmem>>, vector<16x1xf32>,
    } else {
    }
    %c0 = arith.constant 0 : index
    %c0_1 = arith.constant 0 : index
    %3 = vector.load %arg2[%c0, %c0_1] : memref<16x16xf32, #tpu.memory_space<vmem>>, vector<16x16xf32>
    %c0_2 = arith.constant 0 : index
    %c0_3 = arith.constant 0 : index
    %4 = vector.load %arg3[%c0_2, %c0_3] : memref<16x1xi32, #tpu.memory_space<vmem>>, vector<16x1xi32>
    %cst = arith.constant dense<0xFF800000> : vector<16xf32>
    %5 = vector.multi_reduction <maximumf>, %3, %cst [1] : vector<16x16xf32> to vector<16xf32>
    %6 = vector.shape_cast %5 : vector<16xf32> to vector<16x1xf32>
    %7 = vector.broadcast %6 : vector<16x1xf32> to vector<16x16xf32>
    %8 = arith.subf %3, %7 : vector<16x16xf32>
    %9 = math.exp %8 : vector<16x16xf32>
    %cst_4 = arith.constant dense<0.000000e+00> : vector<16xf32>
    %10 = vector.multi_reduction <add>, %9, %cst_4 [1] : vector<16x16xf32> to vector<16xf32>
    %11 = vector.shape_cast %10 : vector<16xf32> to vector<16x1xf32>
    %12 = math.log %11 : vector<16x1xf32>
    %13 = arith.addf %6, %12 : vector<16x1xf32>
    %14 = tpu.iota {dimensions = array<i32: 1>} : vector<16x16xi32>
    %15 = vector.broadcast %4 : vector<16x1xi32> to vector<16x16xi32>
    %16 = arith.cmpi eq, %14, %15 : vector<16x16xi32>
    %cst_5 = arith.constant 8.000000e-01 : f32
    %cst_6 = arith.constant 0.0133333337 : f32
    %17 = vector.broadcast %cst_5 : f32 to vector<16x16xf32>
    %18 = vector.broadcast %cst_6 : f32 to vector<16x16xf32>
    %19 = arith.select %16, %17, %18 : vector<16x16xi1>, vector<16x16xf32>
    %20 = arith.mulf %19, %3 : vector<16x16xf32>
    %cst_7 = arith.constant dense<0.000000e+00> : vector<16xf32>
    %21 = vector.multi_reduction <add>, %20, %cst_7 [1] : vector<16x16xf32> to vector<16xf32>
    %22 = vector.shape_cast %21 : vector<16xf32> to vector<16x1xf32>
    %23 = arith.subf %13, %22 : vector<16x1xf32>
    %c1_i32 = arith.constant 1 : i32
    %24 = arith.muli %arg0, %c1_i32 : i32
    %25 = arith.addi %24, %arg1 : i32
    %c16_i32 = arith.constant 16 : i32
    %26 = arith.muli %25, %c16_i32 : i32
    %27 = tpu.iota {dimensions = array<i32: 0>} : vector<16x1xi32>
    %28 = vector.broadcast %26 : i32 to vector<16x1xi32>
    %29 = arith.addi %28, %27 : vector<16x1xi32>
    %c0_8 = arith.constant 0 : index
    %c0_9 = arith.constant 0 : index
    %30 = vector.load %arg4[%c0_8, %c0_9] : memref<16x1xf32, #tpu.memory_space<vmem>>, vector<16x1xf32>
    %c16_i32_10 = arith.constant 16 : i32
    %31 = vector.broadcast %c16_i32_10 : i32 to vector<16x1xi32>
    %32 = arith.cmpi slt, %29, %31 : vector<16x1xi32>
    %cst_11 = arith.constant 0.000000e+00 : f32
    %33 = vector.broadcast %cst_11 : f32 to vector<16x1xf32>
    %34 = arith.select %32, %23, %33 : vector<16x1xi1>, vector<16x1xf32>
    %35 = arith.addf %30, %34 : vector<16x1xf32>
    %c0_12 = arith.constant 0 : index
    %c0_13 = arith.constant 0 : index
    %36 = vector.load %arg4[%c0_12, %c0_13] : memref<16x1xf32, #tpu.memory_space<vmem>>, vector<16x1xf32>
    tpu.vector_store %arg4[%c0_12, %c0_13], %35 {strides = array<i32>} : memref<16x1xf32, #tpu.memory_space<vmem>>, vector<16x1xf32>,
    return
  }
  func.func @transform_0(%arg0: i32, %arg1: i32) -> (i32, i32) {
    %c1_i32 = arith.constant 1 : i32
    %0 = arith.muli %arg0, %c1_i32 : i32
    %1 = arith.addi %0, %arg1 : i32
    %c0_i32 = arith.constant 0 : i32
    %2 = arith.minsi %1, %c0_i32 : i32
    %c0_i32_0 = arith.constant 0 : i32
    %c0_i32_1 = arith.constant 0 : i32
    return %2, %c0_i32_0 : i32, i32
  }
  func.func @transform_1(%arg0: i32, %arg1: i32) -> (i32, i32) {
    %c1_i32 = arith.constant 1 : i32
    %0 = arith.muli %arg0, %c1_i32 : i32
    %1 = arith.addi %0, %arg1 : i32
    %c0_i32 = arith.constant 0 : i32
    %2 = arith.minsi %1, %c0_i32 : i32
    %c0_i32_0 = arith.constant 0 : i32
    %c0_i32_1 = arith.constant 0 : i32
    return %2, %c0_i32_0 : i32, i32
  }
  func.func @transform_2(%arg0: i32, %arg1: i32) -> (i32, i32) {
    %c0_i32 = arith.constant 0 : i32
    %c0_i32_0 = arith.constant 0 : i32
    return %arg0, %c0_i32 : i32, i32
  }
}

</mosaic_0001>

<llo_original>
// kernel: tpu_custom_call.1
$region0: #{tpu_custom_call.1}
  #allocation0 [shape = 'u32[]', space=smem, size = 0x4, offset = 0x4, fixed_abs, tag = 'smem constant byte address 0x4 - core index']
  #allocation1 [shape = 'u32[144,128]{1,0:T(1,128)}', space=vmem, size = 0x12000, scoped, tag = 'internal scratch']
  %s0 = inlined_call_operand.vmem [shape: f32[16,16], index: 0, kind: input, shape index: {}]
  %s1 = inlined_call_operand.vmem [shape: s32[16,1], index: 1, kind: input, shape index: {}]
  %s2 = inlined_call_operand.vmem [shape: f32[16,1], index: 2, kind: output, shape index: {}]
  %s3 = sld [smem:[#allocation0]]
  $region22: #{tpu_custom_call.1} parent=0
    _
  %s5 = ssub.s32 1, %s3
  %s6 = scalar_select 0, %s5, %s3
  // Predicated region
  $region2: #{tpu_custom_call.1} parent=0 // pred_check
    _
  $region3: #{tpu_custom_call.1} parent=0 // pred_check_branch
    %8 = sbr.rel (0) target = $region5
  $region4: #{tpu_custom_call.1} parent=0 // pred_region
    %s9 = sadd.s32 0, 0
    %p10 = scmp.lt.s32.totalorder %s9, 0
    %s11 = scalar_select %p10, %s9, 0
    %s12 = smul.u32 2, %s11
    %p13 = scmp.lt.s32.totalorder %s12, 1
    %s14 = scalar_select %p13, %s12, 1
    %s15 = smul.addr %s14, 8
    %s16 = scalar_lea.vmem %s0, %s15
    %s17 = sadd.s32 0, 0
    %p18 = scmp.lt.s32.totalorder %s17, 0
    %s19 = scalar_select %p18, %s17, 0
    %s20 = smul.u32 2, %s19
  $region5: #{tpu_custom_call.1} parent=0 // pred_fallthru
    _
  // Predicated region
  $region6: #{tpu_custom_call.1} parent=0 // pred_check
    _
  $region7: #{tpu_custom_call.1} parent=0 // pred_check_branch
    %22 = sbr.rel (0) target = $region9
  $region8: #{tpu_custom_call.1} parent=0 // pred_region
    %s23 = sadd.s32 0, 0
    %p24 = scmp.lt.s32.totalorder %s23, 0
    %s25 = scalar_select %p24, %s23, 0
    %s26 = smul.u32 2, %s25
    %p27 = scmp.lt.s32.totalorder %s26, 1
    %s28 = scalar_select %p27, %s26, 1
    %s29 = smul.addr %s28, 8
    %s30 = scalar_lea.vmem %s1, %s29
    %s31 = sadd.s32 0, 0
    %p32 = scmp.lt.s32.totalorder %s31, 0
    %s33 = scalar_select %p32, %s31, 0
    %s34 = smul.u32 2, %s33
  $region9: #{tpu_custom_call.1} parent=0 // pred_fallthru
    _
  %s35 = sadd.s32 0, 0
  %p36 = scmp.lt.s32.totalorder %s35, 0
  %s37 = scalar_select %p36, %s35, 0
  %s38 = smul.u32 2, %s37
  %p39 = scmp.lt.s32.totalorder %s38, 1
  %s40 = scalar_select %p39, %s38, 1
  %s41 = smul.addr %s40, 8
  %s42 = scalar_lea.vmem %s0, %s41
  %s43 = sadd.s32 0, 0
  %p44 = scmp.lt.s32.totalorder %s43, 0
  %s45 = scalar_select %p44, %s43, 0
  %s46 = smul.u32 2, %s45
  %p47 = scmp.lt.s32.totalorder %s46, 1
  %s48 = scalar_select %p47, %s46, 1
  %s49 = smul.addr %s48, 8
  %s50 = scalar_lea.vmem %s1, %s49
  %s51 = sadd.s32 0, 0
  %p52 = scmp.lt.s32.totalorder %s51, 0
  %s53 = scalar_select %p52, %s51, 0
  %s54 = smul.u32 2, %s53
  %p55 = scmp.lt.s32.totalorder %s54, 1
  %s56 = scalar_select %p55, %s54, 1
  %s57 = smul.addr %s56, 8
  %s58 = scalar_lea.vmem %s0, %s57
  %s59 = sadd.s32 0, 0
  %p60 = scmp.lt.s32.totalorder %s59, 0
  %s61 = scalar_select %p60, %s59, 0
  %s62 = smul.u32 2, %s61
  %s63 = sadd.s32 0, 0
  %p64 = scmp.lt.s32.totalorder %s63, 0
  %s65 = scalar_select %p64, %s63, 0
  %s66 = smul.u32 2, %s65
  %p67 = scmp.lt.s32.totalorder %s66, 1
  %s68 = scalar_select %p67, %s66, 1
  %s69 = smul.addr %s68, 8
  %s70 = scalar_lea.vmem %s1, %s69
  %s71 = sadd.s32 0, 0
  %p72 = scmp.lt.s32.totalorder %s71, 0
  %s73 = scalar_select %p72, %s71, 0
  %s74 = smul.u32 2, %s73
  %p75 = scmp.eq.s32.totalorder 0, 0
  // Predicated region
  $region10: #{tpu_custom_call.1} parent=0 // pred_check
    %p76 = pneg %p75
  $region11: #{tpu_custom_call.1} parent=0 // pred_check_branch
    %78 = sbr.rel (%p76) target = $region13
  $region12: #{tpu_custom_call.1} parent=0 // pred_region
    %vm79 = vcmask 7168
    %80 = vst.msk [vmem:[%s2] sm:$0xff] %vm79, 0.0
    %81 = vst.msk [vmem:[%s2 + $0x8] sm:$0xff] %vm79, 0.0
  $region13: #{tpu_custom_call.1} parent=0 // pred_fallthru
    _
  %v82 = vld [vmem:[%s58] sm:$0xff]
  %v83 = vld [vmem:[%s58 + $0x8] sm:$0xff]
  %v84 = vld [vmem:[%s70] sm:$0xff]
  %v85 = vld [vmem:[%s70 + $0x8] sm:$0xff]
  %vm86 = vcmask 130048
  %v87 = vsel %vm86, %v82, -inf
  %88 = vmax.xlane.f32.xlu0 %v87
  %v89 = vpop.xlane.xlu0 %88
  %v90 = vsel %vm86, %v83, -inf
  %91 = vmax.xlane.f32.xlu0 %v90
  %v92 = vpop.xlane.xlu0 %91
  %v93 = vsub.f32 %v82, %v89
  %v94 = vsub.f32 %v83, %v92
  %v95 = vmul.f32 %v93, 1.442695
  %v96 = vpow.pop %v95
  %v97 = vmul.f32 %v94, 1.442695
  %v98 = vpow.pop %v97
  %v99 = vsel %vm86, %v96, 0.0
  %100 = vadd.xlane.f32.xlu0 %v99
  %v101 = vpop.xlane.xlu0 %100
  %v102 = vsel %vm86, %v98, 0.0
  %103 = vadd.xlane.f32.xlu0 %v102
  %v104 = vpop.xlane.xlu0 %103
  %v105 = vlog2.pop %v101
  %v106 = vmul.f32 %v105, 0.6931472
  %v107 = vlog2.pop %v104
  %v108 = vmul.f32 %v107, 0.6931472
  %v109 = vadd.f32 %v89, %v106
  %v110 = vadd.f32 %v92, %v108
  %v111 = vlaneseq
  %v112 = vand.u32 %v111, 127
  %113 = vset.pattern.permute.xlu0 0
  %114 = vperm.xlu0 %113, %v84
  %v115 = vpop.permute.xlu0 %114
  %116 = vset.pattern.permute.xlu0 0
  %117 = vperm.xlu0 %116, %v85
  %v118 = vpop.permute.xlu0 %117
  %vm119 = vcmp.eq.s32.totalorder %v112, %v115
  %vm120 = vcmp.eq.s32.totalorder %v112, %v118
  %v121 = vsel %vm119, 0.8, 0.013333334
  %v122 = vsel %vm120, 0.8, 0.013333334
  %v123 = vmul.f32 %v121, %v82
  %v124 = vmul.f32 %v122, %v83
  %v125 = vsel %vm86, %v123, 0.0
  %126 = vadd.xlane.f32.xlu0 %v125
  %v127 = vpop.xlane.xlu0 %126
  %v128 = vsel %vm86, %v124, 0.0
  %129 = vadd.xlane.f32.xlu0 %v128
  %v130 = vpop.xlane.xlu0 %129
  %v131 = vsub.f32 %v109, %v127
  %v132 = vsub.f32 %v110, %v130
  %s133 = sadd.s32 0, 0
  %s134 = smul.u32 %s133, 16
  %v135 = vlaneseq
  %v136 = vshrl.u32 %v135, 7
  %v137 = vadd.s32 %v136, 8
  %v138 = vstv %s134
  %v139 = vadd.s32 %v138, %v136
  %v140 = vadd.s32 %v138, %v137
  %v141 = vld [vmem:[%s2] sm:$0xff]
  %v142 = vld [vmem:[%s2 + $0x8] sm:$0xff]
  %vm143 = vcmp.lt.s32.totalorder %v139, 16
  %vm144 = vcmp.lt.s32.totalorder %v140, 16
  %v145 = vsel %vm143, %v131, 0.0
  %v146 = vsel %vm144, %v132, 0.0
  %v147 = vadd.f32 %v141, %v145
  %v148 = vadd.f32 %v142, %v146
  %vm149 = vcmask 7168
  %150 = vst.msk [vmem:[%s2] sm:$0xff] %vm149, %v147
  %151 = vst.msk [vmem:[%s2 + $0x8] sm:$0xff] %vm149, %v148
  // Predicated region
  $region14: #{tpu_custom_call.1} parent=0 // pred_check
    _
  $region15: #{tpu_custom_call.1} parent=0 // pred_check_branch
    %153 = sbr.rel (0) target = $region17
  $region16: #{tpu_custom_call.1} parent=0 // pred_region
    _
  $region17: #{tpu_custom_call.1} parent=0 // pred_fallthru
    _
  // Predicated region
  $region18: #{tpu_custom_call.1} parent=0 // pred_check
    _
  $region19: #{tpu_custom_call.1} parent=0 // pred_check_branch
    %155 = sbr.rel (0) target = $region21
  $region20: #{tpu_custom_call.1} parent=0 // pred_region
    _
  $region21: #{tpu_custom_call.1} parent=0 // pred_fallthru
    _

</llo_original>
